<compile_context>
chip_gen: v5e
topology: v5e:2x2
jax: 0.10.0
libtpu: 0.0.40
codegen_flags: <defaults>
</compile_context>

<pallas_src>
import jax
import jax.numpy as jnp
from jax.experimental import pallas as pl
from jax.experimental.pallas import tpu as pltpu

DIM_MODEL = 4096
N_VOCAB = 2
LN_EPS = 1e-5
_VMEM_LIMIT = 48 << 20


# ------------------------------ Encoder (embedding) ------------------------------

def _encoder_kernel(tok_ref, emb_ref, o_ref):
    # tok_ref: (TM, 1)             int32 token ids
    # emb_ref: (N_VOCAB, DIM_MODEL) embedding table (lane-dense)
    # o_ref:   (TM, DIM_MODEL)
    tok = tok_ref[...]
    out = jnp.zeros(o_ref.shape, jnp.float32)
    # n_vocab == 2: a couple of lane-broadcast selects on the VPU (no gather needed).
    for v in range(N_VOCAB):
        row = emb_ref[pl.ds(v, 1), :].astype(jnp.float32)   # (1, D)
        out = jnp.where(tok == v, row, out)
    o_ref[...] = out.astype(o_ref.dtype)


def encoder_forward(tokens, emb_weight, *, tm=512):
    """tokens: (B, S) int32 in [0, N_VOCAB); emb_weight: (N_VOCAB, DIM_MODEL)."""
    B, S = tokens.shape
    V, D = emb_weight.shape
    assert V == N_VOCAB and D == DIM_MODEL
    M = B * S
    tm = min(tm, max(8, pl.cdiv(M, 8) * 8))
    m_pad = pl.cdiv(M, tm) * tm

    tok2d = tokens.reshape(M, 1).astype(jnp.int32)
    if m_pad != M:
        tok2d = jnp.pad(tok2d, ((0, m_pad - M), (0, 0)))

    out = pl.pallas_call(
        _encoder_kernel,
        out_shape=jax.ShapeDtypeStruct((m_pad, D), emb_weight.dtype),
        grid_spec=pl.GridSpec(
            grid=(m_pad // tm,),
            in_specs=[
                pl.BlockSpec((tm, 1), lambda i: (i, 0)),
                pl.BlockSpec((N_VOCAB, D), lambda i: (0, 0)),
            ],
            out_specs=pl.BlockSpec((tm, D), lambda i: (i, 0)),
        ),
        compiler_params=pltpu.CompilerParams(
            dimension_semantics=("parallel",),
            vmem_limit_bytes=_VMEM_LIMIT,
        ),
    )(tok2d, emb_weight)

    return out[:M].reshape(B, S, D)


# ----------------------- Decoder (LayerNorm -> Linear, no bias) -------------------

def _decoder_kernel(x_ref, w_ref, wsum_ref, b_ref, o_ref):
    # x_ref:    (TM, DIM_MODEL)       activation tile
    # w_ref:    (N_VOCAB, DIM_MODEL)  gamma-folded decoder weight (lane-dense)
    # wsum_ref: (1, N_VOCAB)          per-output-row sum of w_ref
    # b_ref:    (1, N_VOCAB)          beta folded through the decoder weight
    # o_ref:    (TM, N_VOCAB)         logits tile
    x = x_ref[...].astype(jnp.float32)

    # One-pass LayerNorm statistics (biased variance, matching torch).
    inv_d = jnp.float32(1.0 / DIM_MODEL)
    s = jnp.sum(x, axis=-1, keepdims=True)
    ss = jnp.sum(x * x, axis=-1, keepdims=True)
    mean = s * inv_d
    var = jnp.maximum(ss * inv_d - mean * mean, 0.0)
    inv = jax.lax.rsqrt(var + LN_EPS)                       # (TM, 1)

    # Raw contraction on un-normalized x: (TM, D) x (N_VOCAB, D) -> (TM, N_VOCAB).
    raw = jax.lax.dot_general(
        x,
        w_ref[...].astype(jnp.float32),
        (((1,), (1,)), ((), ())),
        preferred_element_type=jnp.float32,
    )
    # Fold normalization in as per-row scalars:
    #   ((x - mean) * inv) @ W'^T = inv * (x @ W'^T - mean * rowsum(W'))
    o_ref[...] = ((raw - mean * wsum_ref[...]) * inv + b_ref[...]).astype(o_ref.dtype)


def decoder_forward(x, gamma, beta, weight, *, tm=512):
    """x: (B, S, DIM_MODEL); gamma/beta: (DIM_MODEL,); weight: (N_VOCAB, DIM_MODEL)."""
    B, S, D = x.shape
    assert D == DIM_MODEL
    V = weight.shape[0]
    M = B * S
    tm = min(tm, max(8, pl.cdiv(M, 8) * 8))
    m_pad = pl.cdiv(M, tm) * tm

    x2d = x.reshape(M, D)
    if m_pad != M:
        x2d = jnp.pad(x2d, ((0, m_pad - M), (0, 0)))

    # Fold the LayerNorm affine into the decoder weight / bias (done once, in XLA).
    gamma_f = gamma.astype(jnp.float32)
    beta_f = beta.astype(jnp.float32)
    w_f = weight.astype(jnp.float32)
    w_folded = w_f * gamma_f[None, :]                              # (N_VOCAB, DIM_MODEL)
    b_folded = jnp.sum(w_f * beta_f[None, :], axis=1).reshape(1, V)  # (1, N_VOCAB)
    w_rowsum = jnp.sum(w_folded, axis=1).reshape(1, V)               # (1, N_VOCAB)

    out = pl.pallas_call(
        _decoder_kernel,
        out_shape=jax.ShapeDtypeStruct((m_pad, V), jnp.float32),
        grid_spec=pl.GridSpec(
            grid=(m_pad // tm,),
            in_specs=[
                pl.BlockSpec((tm, D), lambda i: (i, 0)),
                pl.BlockSpec((V, D), lambda i: (0, 0)),
                pl.BlockSpec((1, V), lambda i: (0, 0)),
                pl.BlockSpec((1, V), lambda i: (0, 0)),
            ],
            out_specs=pl.BlockSpec((tm, V), lambda i: (i, 0)),
        ),
        compiler_params=pltpu.CompilerParams(
            dimension_semantics=("parallel",),
            vmem_limit_bytes=_VMEM_LIMIT,
        ),
    )(x2d, w_folded, w_rowsum, b_folded)

    return out[:M].reshape(B, S, V)


# ------------------------------------ reference ------------------------------------

def _decoder_reference(x, gamma, beta, weight):
    xf = x.astype(jnp.float32)
    mean = jnp.mean(xf, axis=-1, keepdims=True)
    var = jnp.mean((xf - mean) ** 2, axis=-1, keepdims=True)
    ln = (xf - mean) * jax.lax.rsqrt(var + LN_EPS) * gamma + beta
    return ln @ weight.T


if __name__ == "__main__":
    key = jax.random.PRNGKey(0)
    k_tok, k_emb, kx, kg, kb, kw = jax.random.split(key, 6)

    B, S = 2, 8

    # --- Encoder: nn.Embedding(2, 4096), weight scaled by 0.001 ---
    tokens = jax.random.randint(k_tok, (B, S), 0, N_VOCAB, dtype=jnp.int32)
    emb_weight = 0.001 * jax.random.normal(k_emb, (N_VOCAB, DIM_MODEL), dtype=jnp.float32)

    h = jax.block_until_ready(encoder_forward(tokens, emb_weight))
    h_ref = emb_weight[tokens]
    assert h.shape == (B, S, DIM_MODEL)
    assert jnp.allclose(h, h_ref, atol=1e-6, rtol=1e-6), \
        f"encoder max abs err = {float(jnp.max(jnp.abs(h - h_ref)))}"

    # TODO(synk): the 4 Mamba(dim_model) mixer layers sit between Encoder and Decoder
    # in MambaBit but the Mamba class is not defined in the provided source, so they
    # are not translated here.

    # --- Decoder: LayerNorm(4096) -> Linear(4096, 2, bias=False), weight * 0.001 ---
    x = jax.random.normal(kx, (B, S, DIM_MODEL), dtype=jnp.float32)
    gamma = 1.0 + 0.01 * jax.random.normal(kg, (DIM_MODEL,), dtype=jnp.float32)
    beta = 0.01 * jax.random.normal(kb, (DIM_MODEL,), dtype=jnp.float32)
    weight = 0.001 * jax.random.normal(kw, (N_VOCAB, DIM_MODEL), dtype=jnp.float32)

    logits = jax.block_until_ready(decoder_forward(x, gamma, beta, weight))
    ref = _decoder_reference(x, gamma, beta, weight)
    assert logits.shape == (B, S, N_VOCAB)
    err = float(jnp.max(jnp.abs(logits - ref)))
    assert jnp.allclose(logits, ref, atol=1e-4, rtol=1e-4), f"decoder max abs err = {err}"

    print("KERNEL_OK")
</pallas_src>

<mosaic_0001>
module attributes {stable_mosaic.version = 11 : i64} {
  func.func @_encoder_kernel(%arg0: i32, %arg1: memref<16x1xi32, #tpu.memory_space<vmem>>, %arg2: memref<2x4096xf32, #tpu.memory_space<vmem>>, %arg3: memref<16x4096xf32, #tpu.memory_space<vmem>>) attributes {dimension_semantics = [#tpu.dimension_semantics<parallel>], iteration_bounds = array<i64: 1>, scalar_prefetch = 0 : i64, scratch_operands = 0 : i64, tpu.core_type = #tpu.core_type<tc>, window_params = [{transform_indices = @transform_0, window_bounds = array<i64: 16, 1>}, {pipeline_mode = #tpu.pipeline_mode<synchronous>, transform_indices = @transform_1, window_bounds = array<i64: 2, 4096>}, {transform_indices = @transform_2, window_bounds = array<i64: 16, 4096>}]} {
    %c0 = arith.constant 0 : index
    %c0_0 = arith.constant 0 : index
    %0 = vector.load %arg1[%c0, %c0_0] : memref<16x1xi32, #tpu.memory_space<vmem>>, vector<16x1xi32>
    %cst = arith.constant 0.000000e+00 : f32
    %1 = vector.broadcast %cst : f32 to vector<16x4096xf32>
    %c0_1 = arith.constant 0 : index
    %c0_2 = arith.constant 0 : index
    %2 = vector.load %arg2[%c0_1, %c0_2] : memref<2x4096xf32, #tpu.memory_space<vmem>>, vector<1x4096xf32>
    %c0_i32 = arith.constant 0 : i32
    %3 = vector.broadcast %c0_i32 : i32 to vector<16x1xi32>
    %4 = arith.cmpi eq, %0, %3 : vector<16x1xi32>
    %5 = vector.shape_cast %4 : vector<16x1xi1> to vector<16x1xi1>
    %6 = vector.broadcast %5 : vector<16x1xi1> to vector<16x4096xi1>
    %7 = vector.shape_cast %2 : vector<1x4096xf32> to vector<1x4096xf32>
    %8 = vector.broadcast %7 : vector<1x4096xf32> to vector<16x4096xf32>
    %9 = arith.select %6, %8, %1 : vector<16x4096xi1>, vector<16x4096xf32>
    %c1 = arith.constant 1 : index
    %c0_3 = arith.constant 0 : index
    %10 = vector.load %arg2[%c1, %c0_3] : memref<2x4096xf32, #tpu.memory_space<vmem>>, vector<1x4096xf32>
    %c1_i32 = arith.constant 1 : i32
    %11 = vector.broadcast %c1_i32 : i32 to vector<16x1xi32>
    %12 = arith.cmpi eq, %0, %11 : vector<16x1xi32>
    %13 = vector.shape_cast %12 : vector<16x1xi1> to vector<16x1xi1>
    %14 = vector.broadcast %13 : vector<16x1xi1> to vector<16x4096xi1>
    %15 = vector.shape_cast %10 : vector<1x4096xf32> to vector<1x4096xf32>
    %16 = vector.broadcast %15 : vector<1x4096xf32> to vector<16x4096xf32>
    %17 = arith.select %14, %16, %9 : vector<16x4096xi1>, vector<16x4096xf32>
    %c0_4 = arith.constant 0 : index
    %c0_5 = arith.constant 0 : index
    %18 = vector.load %arg3[%c0_4, %c0_5] : memref<16x4096xf32, #tpu.memory_space<vmem>>, vector<16x4096xf32>
    tpu.vector_store %arg3[%c0_4, %c0_5], %17 {strides = array<i32>} : memref<16x4096xf32, #tpu.memory_space<vmem>>, vector<16x4096xf32>,
    return
  }
  func.func @transform_0(%arg0: i32) -> (i32, i32) {
    %c0_i32 = arith.constant 0 : i32
    %c0_i32_0 = arith.constant 0 : i32
    return %arg0, %c0_i32 : i32, i32
  }
  func.func @transform_1(%arg0: i32) -> (i32, i32) {
    %c0_i32 = arith.constant 0 : i32
    %c0_i32_0 = arith.constant 0 : i32
    %c0_i32_1 = arith.constant 0 : i32
    return %c0_i32, %c0_i32_0 : i32, i32
  }
  func.func @transform_2(%arg0: i32) -> (i32, i32) {
    %c0_i32 = arith.constant 0 : i32
    %c0_i32_0 = arith.constant 0 : i32
    return %arg0, %c0_i32 : i32, i32
  }
}

</mosaic_0001>

<llo_original>
// kernel: tpu_custom_call.1
$region0: #{tpu_custom_call.1}
  #allocation0 [shape = 'u32[]', space=smem, size = 0x4, offset = 0x4, fixed_abs, tag = 'smem constant byte address 0x4 - core index']
  #allocation1 [shape = 'u32[72,128]{1,0:T(1,128)}', space=vmem, size = 0x9000, scoped, tag = 'internal scratch']
  %s0 = inlined_call_operand.vmem [shape: s32[16,1], index: 0, kind: input, shape index: {}]
  %s1 = inlined_call_operand.hbm [shape: f32[2,4096], index: 1, kind: input, shape index: {}]
  %s2 = inlined_call_operand.hbm [shape: f32[16,4096], index: 2, kind: output, shape index: {}]
  %s3 = sld [smem:[#allocation0]]
  $region22: #{tpu_custom_call.1} parent=0
    _
  %s5 = ssub.s32 1, %s3
  %s6 = scalar_select 0, %s5, %s3
  $region1: #{tpu_custom_call.1} parent=0
    #allocation2 [shape = 'u8[32768]{0}', space=vmem, size = 0x8000, scoped, tag = 'input window, operand 1, single buffered']
    #allocation3 [shape = 's32[1]{0}', space=sflag, size = 0x4, scoped, tag = 'scoped memory for tpu_custom_call.1']
    #allocation4 [shape = 's32[1]{0}', space=sflag, size = 0x4, scoped, tag = 'scoped memory for tpu_custom_call.1']
    #allocation5 [shape = 'u8[262144]{0}', space=vmem, size = 0x40000, scoped, tag = 'output window, operand 0, single buffered']
    %7 = vsyncpa [#allocation3], 0
    %8 = vsyncpa [#allocation4], 0
    // Predicated region
    $region2: #{tpu_custom_call.1} parent=1 // pred_check
      _
    $region3: #{tpu_custom_call.1} parent=1 // pred_check_branch
      %10 = sbr.rel (0) target = $region5
    $region4: #{tpu_custom_call.1} parent=1 // pred_region
      _
    $region5: #{tpu_custom_call.1} parent=1 // pred_fallthru
      _
    // Predicated region
    $region6: #{tpu_custom_call.1} parent=1 // pred_check
      _
    $region7: #{tpu_custom_call.1} parent=1 // pred_check_branch
      %12 = sbr.rel (0) target = $region9
    $region8: #{tpu_custom_call.1} parent=1 // pred_region
      %14 = vsyncadd [#allocation3], 0
      %s16 = sshll.u32 %s1, 4
      %s17 = int_to_ptr.hbm [resolvable:$true] %s16
      %s18 = sshll.u32 [#allocation2], 4
      %s19 = int_to_ptr.vmem [resolvable:$true] %s18
      %21 = dma.hbm_to_vmem [thread:$0]  %s17, 1024, %s19, [#allocation3]
    $region9: #{tpu_custom_call.1} parent=1 // pred_fallthru
      _
    // Predicated region
    $region10: #{tpu_custom_call.1} parent=1 // pred_check
      _
    $region11: #{tpu_custom_call.1} parent=1 // pred_check_branch
      %23 = sbr.rel (0) target = $region13
    $region12: #{tpu_custom_call.1} parent=1 // pred_region
      %25 = dma.done [#allocation3], 1024
    $region13: #{tpu_custom_call.1} parent=1 // pred_fallthru
      _
    %v26 = vld [vmem:[%s0] sm:$0xff]
    %v27 = vld [vmem:[%s0 + $0x8] sm:$0xff]
    %v28 = vld [vmem:[#allocation2] ss:$2 sm:$0xff]
    %s29 = scalar_lea.vmem [#allocation2], 16
    %v30 = vld [vmem:[%s29] ss:$2 sm:$0xff]
    %s31 = scalar_lea.vmem [#allocation2], 32
    %v32 = vld [vmem:[%s31] ss:$2 sm:$0xff]
    %s33 = scalar_lea.vmem [#allocation2], 48
    %v34 = vld [vmem:[%s33] ss:$2 sm:$0xff]
    %vm35 = vcmp.eq.s32.totalorder %v26, 0
    %vm36 = vcmp.eq.s32.totalorder %v27, 0
    %v37 = vsel %vm35, 1, 0
    %v38 = vsel %vm36, 1, 0
    %39 = vset.pattern.permute.xlu0 0
    %40 = vperm.xlu0 %39, %v37
    %v41 = vpop.permute.xlu0 %40
    %42 = vset.pattern.permute.xlu0 0
    %43 = vperm.xlu0 %42, %v38
    %v44 = vpop.permute.xlu0 %43
    %vm45 = vcmp.eq.s32.totalorder %v41, 1
    %vm46 = vcmp.eq.s32.totalorder %v44, 1
    %v51 = vperm.slane %v28, 0
    %v52 = vperm.slane %v28, 1
    %v53 = vperm.slane %v28, 2
    %v54 = vperm.slane %v28, 3
    %v55 = vperm.slane %v28, 4
    %v56 = vperm.slane %v28, 5
    %v57 = vperm.slane %v28, 6
    %v58 = vperm.slane %v28, 7
    %v59 = vperm.slane %v30, 0
    %v60 = vperm.slane %v30, 1
    %v61 = vperm.slane %v30, 2
    %v62 = vperm.slane %v30, 3
    %v63 = vperm.slane %v30, 4
    %v64 = vperm.slane %v30, 5
    %v65 = vperm.slane %v30, 6
    %v66 = vperm.slane %v30, 7
    %v67 = vperm.slane %v32, 0
    %v68 = vperm.slane %v32, 1
    %v69 = vperm.slane %v32, 2
    %v70 = vperm.slane %v32, 3
    %v71 = vperm.slane %v32, 4
    %v72 = vperm.slane %v32, 5
    %v73 = vperm.slane %v32, 6
    %v74 = vperm.slane %v32, 7
    %v75 = vperm.slane %v34, 0
    %v76 = vperm.slane %v34, 1
    %v77 = vperm.slane %v34, 2
    %v78 = vperm.slane %v34, 3
    %v79 = vperm.slane %v34, 4
    %v80 = vperm.slane %v34, 5
    %v81 = vperm.slane %v34, 6
    %v82 = vperm.slane %v34, 7
    %v115 = vsel %vm45, %v51, 0.0
    %v116 = vsel %vm45, %v52, 0.0
    %v117 = vsel %vm45, %v53, 0.0
    %v118 = vsel %vm45, %v54, 0.0
    %v119 = vsel %vm45, %v55, 0.0
    %v120 = vsel %vm45, %v56, 0.0
    %v121 = vsel %vm45, %v57, 0.0
    %v122 = vsel %vm45, %v58, 0.0
    %v123 = vsel %vm45, %v59, 0.0
    %v124 = vsel %vm45, %v60, 0.0
    %v125 = vsel %vm45, %v61, 0.0
    %v126 = vsel %vm45, %v62, 0.0
    %v127 = vsel %vm45, %v63, 0.0
    %v128 = vsel %vm45, %v64, 0.0
    %v129 = vsel %vm45, %v65, 0.0
    %v130 = vsel %vm45, %v66, 0.0
    %v131 = vsel %vm45, %v67, 0.0
    %v132 = vsel %vm45, %v68, 0.0
    %v133 = vsel %vm45, %v69, 0.0
    %v134 = vsel %vm45, %v70, 0.0
    %v135 = vsel %vm45, %v71, 0.0
    %v136 = vsel %vm45, %v72, 0.0
    %v137 = vsel %vm45, %v73, 0.0
    %v138 = vsel %vm45, %v74, 0.0
    %v139 = vsel %vm45, %v75, 0.0
    %v140 = vsel %vm45, %v76, 0.0
    %v141 = vsel %vm45, %v77, 0.0
    %v142 = vsel %vm45, %v78, 0.0
    %v143 = vsel %vm45, %v79, 0.0
    %v144 = vsel %vm45, %v80, 0.0
    %v145 = vsel %vm45, %v81, 0.0
    %v146 = vsel %vm45, %v82, 0.0
    %v147 = vsel %vm46, %v51, 0.0
    %v148 = vsel %vm46, %v52, 0.0
    %v149 = vsel %vm46, %v53, 0.0
    %v150 = vsel %vm46, %v54, 0.0
    %v151 = vsel %vm46, %v55, 0.0
    %v152 = vsel %vm46, %v56, 0.0
    %v153 = vsel %vm46, %v57, 0.0
    %v154 = vsel %vm46, %v58, 0.0
    %v155 = vsel %vm46, %v59, 0.0
    %v156 = vsel %vm46, %v60, 0.0
    %v157 = vsel %vm46, %v61, 0.0
    %v158 = vsel %vm46, %v62, 0.0
    %v159 = vsel %vm46, %v63, 0.0
    %v160 = vsel %vm46, %v64, 0.0
    %v161 = vsel %vm46, %v65, 0.0
    %v162 = vsel %vm46, %v66, 0.0
    %v163 = vsel %vm46, %v67, 0.0
    %v164 = vsel %vm46, %v68, 0.0
    %v165 = vsel %vm46, %v69, 0.0
    %v166 = vsel %vm46, %v70, 0.0
    %v167 = vsel %vm46, %v71, 0.0
    %v168 = vsel %vm46, %v72, 0.0
    %v169 = vsel %vm46, %v73, 0.0
    %v170 = vsel %vm46, %v74, 0.0
    %v171 = vsel %vm46, %v75, 0.0
    %v172 = vsel %vm46, %v76, 0.0
    %v173 = vsel %vm46, %v77, 0.0
    %v174 = vsel %vm46, %v78, 0.0
    %v175 = vsel %vm46, %v79, 0.0
    %v176 = vsel %vm46, %v80, 0.0
    %v177 = vsel %vm46, %v81, 0.0
    %v178 = vsel %vm46, %v82, 0.0
    %s179 = scalar_lea.vmem [#allocation2], 1
    %v180 = vld [vmem:[%s179] ss:$2 sm:$0xff]
    %s181 = scalar_lea.vmem [#allocation2], 17
    %v182 = vld [vmem:[%s181] ss:$2 sm:$0xff]
    %s183 = scalar_lea.vmem [#allocation2], 33
    %v184 = vld [vmem:[%s183] ss:$2 sm:$0xff]
    %s185 = scalar_lea.vmem [#allocation2], 49
    %v186 = vld [vmem:[%s185] ss:$2 sm:$0xff]
    %vm187 = vcmp.eq.s32.totalorder %v26, 1
    %vm188 = vcmp.eq.s32.totalorder %v27, 1
    %v189 = vsel %vm187, 1, 0
    %v190 = vsel %vm188, 1, 0
    %191 = vset.pattern.permute.xlu0 0
    %192 = vperm.xlu0 %191, %v189
    %v193 = vpop.permute.xlu0 %192
    %194 = vset.pattern.permute.xlu0 0
    %195 = vperm.xlu0 %194, %v190
    %v196 = vpop.permute.xlu0 %195
    %vm197 = vcmp.eq.s32.totalorder %v193, 1
    %vm198 = vcmp.eq.s32.totalorder %v196, 1
    %v203 = vperm.slane %v180, 0
    %v204 = vperm.slane %v180, 1
    %v205 = vperm.slane %v180, 2
    %v206 = vperm.slane %v180, 3
    %v207 = vperm.slane %v180, 4
    %v208 = vperm.slane %v180, 5
    %v209 = vperm.slane %v180, 6
    %v210 = vperm.slane %v180, 7
    %v211 = vperm.slane %v182, 0
    %v212 = vperm.slane %v182, 1
    %v213 = vperm.slane %v182, 2
    %v214 = vperm.slane %v182, 3
    %v215 = vperm.slane %v182, 4
    %v216 = vperm.slane %v182, 5
    %v217 = vperm.slane %v182, 6
    %v218 = vperm.slane %v182, 7
    %v219 = vperm.slane %v184, 0
    %v220 = vperm.slane %v184, 1
    %v221 = vperm.slane %v184, 2
    %v222 = vperm.slane %v184, 3
    %v223 = vperm.slane %v184, 4
    %v224 = vperm.slane %v184, 5
    %v225 = vperm.slane %v184, 6
    %v226 = vperm.slane %v184, 7
    %v227 = vperm.slane %v186, 0
    %v228 = vperm.slane %v186, 1
    %v229 = vperm.slane %v186, 2
    %v230 = vperm.slane %v186, 3
    %v231 = vperm.slane %v186, 4
    %v232 = vperm.slane %v186, 5
    %v233 = vperm.slane %v186, 6
    %v234 = vperm.slane %v186, 7
    %v267 = vsel %vm197, %v203, %v115
    %v268 = vsel %vm197, %v204, %v116
    %v269 = vsel %vm197, %v205, %v117
    %v270 = vsel %vm197, %v206, %v118
    %v271 = vsel %vm197, %v207, %v119
    %v272 = vsel %vm197, %v208, %v120
    %v273 = vsel %vm197, %v209, %v121
    %v274 = vsel %vm197, %v210, %v122
    %v275 = vsel %vm197, %v211, %v123
    %v276 = vsel %vm197, %v212, %v124
    %v277 = vsel %vm197, %v213, %v125
    %v278 = vsel %vm197, %v214, %v126
    %v279 = vsel %vm197, %v215, %v127
    %v280 = vsel %vm197, %v216, %v128
    %v281 = vsel %vm197, %v217, %v129
    %v282 = vsel %vm197, %v218, %v130
    %v283 = vsel %vm197, %v219, %v131
    %v284 = vsel %vm197, %v220, %v132
    %v285 = vsel %vm197, %v221, %v133
    %v286 = vsel %vm197, %v222, %v134
    %v287 = vsel %vm197, %v223, %v135
    %v288 = vsel %vm197, %v224, %v136
    %v289 = vsel %vm197, %v225, %v137
    %v290 = vsel %vm197, %v226, %v138
    %v291 = vsel %vm197, %v227, %v139
    %v292 = vsel %vm197, %v228, %v140
    %v293 = vsel %vm197, %v229, %v141
    %v294 = vsel %vm197, %v230, %v142
    %v295 = vsel %vm197, %v231, %v143
    %v296 = vsel %vm197, %v232, %v144
    %v297 = vsel %vm197, %v233, %v145
    %v298 = vsel %vm197, %v234, %v146
    %v299 = vsel %vm198, %v203, %v147
    %v300 = vsel %vm198, %v204, %v148
    %v301 = vsel %vm198, %v205, %v149
    %v302 = vsel %vm198, %v206, %v150
    %v303 = vsel %vm198, %v207, %v151
    %v304 = vsel %vm198, %v208, %v152
    %v305 = vsel %vm198, %v209, %v153
    %v306 = vsel %vm198, %v210, %v154
    %v307 = vsel %vm198, %v211, %v155
    %v308 = vsel %vm198, %v212, %v156
    %v309 = vsel %vm198, %v213, %v157
    %v310 = vsel %vm198, %v214, %v158
    %v311 = vsel %vm198, %v215, %v159
    %v312 = vsel %vm198, %v216, %v160
    %v313 = vsel %vm198, %v217, %v161
    %v314 = vsel %vm198, %v218, %v162
    %v315 = vsel %vm198, %v219, %v163
    %v316 = vsel %vm198, %v220, %v164
    %v317 = vsel %vm198, %v221, %v165
    %v318 = vsel %vm198, %v222, %v166
    %v319 = vsel %vm198, %v223, %v167
    %v320 = vsel %vm198, %v224, %v168
    %v321 = vsel %vm198, %v225, %v169
    %v322 = vsel %vm198, %v226, %v170
    %v323 = vsel %vm198, %v227, %v171
    %v324 = vsel %vm198, %v228, %v172
    %v325 = vsel %vm198, %v229, %v173
    %v326 = vsel %vm198, %v230, %v174
    %v327 = vsel %vm198, %v231, %v175
    %v328 = vsel %vm198, %v232, %v176
    %v329 = vsel %vm198, %v233, %v177
    %v330 = vsel %vm198, %v234, %v178
    %331 = vst [vmem:[#allocation5] sm:$0xff] %v267
    %332 = vst [vmem:[#allocation5 + $0x8] sm:$0xff] %v268
    %333 = vst [vmem:[#allocation5 + $0x10] sm:$0xff] %v269
    %334 = vst [vmem:[#allocation5 + $0x18] sm:$0xff] %v270
    %335 = vst [vmem:[#allocation5 + $0x20] sm:$0xff] %v271
    %336 = vst [vmem:[#allocation5 + $0x28] sm:$0xff] %v272
    %337 = vst [vmem:[#allocation5 + $0x30] sm:$0xff] %v273
    %338 = vst [vmem:[#allocation5 + $0x38] sm:$0xff] %v274
    %339 = vst [vmem:[#allocation5 + $0x40] sm:$0xff] %v275
    %340 = vst [vmem:[#allocation5 + $0x48] sm:$0xff] %v276
    %341 = vst [vmem:[#allocation5 + $0x50] sm:$0xff] %v277
    %342 = vst [vmem:[#allocation5 + $0x58] sm:$0xff] %v278
    %343 = vst [vmem:[#allocation5 + $0x60] sm:$0xff] %v279
    %344 = vst [vmem:[#allocation5 + $0x68] sm:$0xff] %v280
    %345 = vst [vmem:[#allocation5 + $0x70] sm:$0xff] %v281
    %346 = vst [vmem:[#allocation5 + $0x78] sm:$0xff] %v282
    %347 = vst [vmem:[#allocation5 + $0x80] sm:$0xff] %v283
    %348 = vst [vmem:[#allocation5 + $0x88] sm:$0xff] %v284
    %349 = vst [vmem:[#allocation5 + $0x90] sm:$0xff] %v285
    %350 = vst [vmem:[#allocation5 + $0x98] sm:$0xff] %v286
    %351 = vst [vmem:[#allocation5 + $0xa0] sm:$0xff] %v287
    %352 = vst [vmem:[#allocation5 + $0xa8] sm:$0xff] %v288
    %353 = vst [vmem:[#allocation5 + $0xb0] sm:$0xff] %v289
    %354 = vst [vmem:[#allocation5 + $0xb8] sm:$0xff] %v290
    %355 = vst [vmem:[#allocation5 + $0xc0] sm:$0xff] %v291
    %356 = vst [vmem:[#allocation5 + $0xc8] sm:$0xff] %v292
    %357 = vst [vmem:[#allocation5 + $0xd0] sm:$0xff] %v293
    %358 = vst [vmem:[#allocation5 + $0xd8] sm:$0xff] %v294
    %359 = vst [vmem:[#allocation5 + $0xe0] sm:$0xff] %v295
    %360 = vst [vmem:[#allocation5 + $0xe8] sm:$0xff] %v296
    %361 = vst [vmem:[#allocation5 + $0xf0] sm:$0xff] %v297
    %362 = vst [vmem:[#allocation5 + $0xf8] sm:$0xff] %v298
    %363 = vst [vmem:[#allocation5 + $0x100] sm:$0xff] %v299
    %364 = vst [vmem:[#allocation5 + $0x108] sm:$0xff] %v300
    %365 = vst [vmem:[#allocation5 + $0x110] sm:$0xff] %v301
    %366 = vst [vmem:[#allocation5 + $0x118] sm:$0xff] %v302
    %367 = vst [vmem:[#allocation5 + $0x120] sm:$0xff] %v303
    %368 = vst [vmem:[#allocation5 + $0x128] sm:$0xff] %v304
    %369 = vst [vmem:[#allocation5 + $0x130] sm:$0xff] %v305
    %370 = vst [vmem:[#allocation5 + $0x138] sm:$0xff] %v306
    %371 = vst [vmem:[#allocation5 + $0x140] sm:$0xff] %v307
    %372 = vst [vmem:[#allocation5 + $0x148] sm:$0xff] %v308
    %373 = vst [vmem:[#allocation5 + $0x150] sm:$0xff] %v309
    %374 = vst [vmem:[#allocation5 + $0x158] sm:$0xff] %v310
    %375 = vst [vmem:[#allocation5 + $0x160] sm:$0xff] %v311
    %376 = vst [vmem:[#allocation5 + $0x168] sm:$0xff] %v312
    %377 = vst [vmem:[#allocation5 + $0x170] sm:$0xff] %v313
    %378 = vst [vmem:[#allocation5 + $0x178] sm:$0xff] %v314
    %379 = vst [vmem:[#allocation5 + $0x180] sm:$0xff] %v315
    %380 = vst [vmem:[#allocation5 + $0x188] sm:$0xff] %v316
    %381 = vst [vmem:[#allocation5 + $0x190] sm:$0xff] %v317
    %382 = vst [vmem:[#allocation5 + $0x198] sm:$0xff] %v318
    %383 = vst [vmem:[#allocation5 + $0x1a0] sm:$0xff] %v319
    %384 = vst [vmem:[#allocation5 + $0x1a8] sm:$0xff] %v320
    %385 = vst [vmem:[#allocation5 + $0x1b0] sm:$0xff] %v321
    %386 = vst [vmem:[#allocation5 + $0x1b8] sm:$0xff] %v322
    %387 = vst [vmem:[#allocation5 + $0x1c0] sm:$0xff] %v323
    %388 = vst [vmem:[#allocation5 + $0x1c8] sm:$0xff] %v324
    %389 = vst [vmem:[#allocation5 + $0x1d0] sm:$0xff] %v325
    %390 = vst [vmem:[#allocation5 + $0x1d8] sm:$0xff] %v326
    %391 = vst [vmem:[#allocation5 + $0x1e0] sm:$0xff] %v327
    %392 = vst [vmem:[#allocation5 + $0x1e8] sm:$0xff] %v328
    %393 = vst [vmem:[#allocation5 + $0x1f0] sm:$0xff] %v329
    %394 = vst [vmem:[#allocation5 + $0x1f8] sm:$0xff] %v330
    // Predicated region
    $region14: #{tpu_custom_call.1} parent=1 // pred_check
      _
    $region15: #{tpu_custom_call.1} parent=1 // pred_check_branch
      %396 = sbr.rel (0) target = $region17
    $region16: #{tpu_custom_call.1} parent=1 // pred_region
      %398 = vsyncadd [#allocation4], 0
      %s399 = sshll.u32 [#allocation5], 4
      %s400 = int_to_ptr.vmem [resolvable:$true] %s399
      %s401 = sshll.u32 %s2, 4
      %s402 = int_to_ptr.hbm [resolvable:$true] %s401
      %407 = dma.vmem_to_hbm [thread:$0]  %s400, 8192, %s402, [#allocation4], 4096, 4096, 256
    $region17: #{tpu_custom_call.1} parent=1 // pred_fallthru
      _
    // Predicated region
    $region18: #{tpu_custom_call.1} parent=1 // pred_check
      _
    $region19: #{tpu_custom_call.1} parent=1 // pred_check_branch
      %409 = sbr.rel (0) target = $region21
    $region20: #{tpu_custom_call.1} parent=1 // pred_region
      %411 = dma.done [#allocation4], 8192
    $region21: #{tpu_custom_call.1} parent=1 // pred_fallthru
      _
    %412 = vsyncpa [#allocation3], 1
    %413 = vsyncpa [#allocation4], 1

</llo_original>
